<compile_context>
chip_gen: v7x
topology: tpu7x:2x2x1
jax: 0.10.0
libtpu: 0.0.40
codegen_flags: <defaults>
</compile_context>

<pallas_src>
import functools

import jax
import jax.numpy as jnp
from jax.experimental import pallas as pl
from jax.experimental.pallas import tpu as pltpu


def _round_up(x, m):
    return ((x + m - 1) // m) * m


def _tree_lstm_kernel(hl_ref, hr_ref, cl_ref, cr_ref, w_ref, b_ref,
                      h_out_ref, c_out_ref, *, hidden_dim):
    H = hidden_dim                       # (padded) hidden dim, multiple of 128

    hl = hl_ref[...]
    hr = hr_ref[...]
    cl = cl_ref[...]
    cr = cr_ref[...]

    # concat([hl, hr], -1) @ W  ==  hl @ W[:H] + hr @ W[H:]
    # Slice the *ref* (zero-cost static views), not a loaded value.
    v = (jnp.dot(hl, w_ref[:H, :], preferred_element_type=jnp.float32)
         + jnp.dot(hr, w_ref[H:, :], preferred_element_type=jnp.float32)
         + b_ref[...])                   # (tm, 5H)

    # Lane-aligned gate slices (H is a multiple of 128).
    i_g = v[:, 0 * H:1 * H]
    fl_g = v[:, 1 * H:2 * H]
    fr_g = v[:, 2 * H:3 * H]
    u_g = v[:, 3 * H:4 * H]
    o_g = v[:, 4 * H:5 * H]

    c = (cl * jax.nn.sigmoid(fl_g + 1.0)
         + cr * jax.nn.sigmoid(fr_g + 1.0)
         + jnp.tanh(u_g) * jax.nn.sigmoid(i_g))
    h = jax.nn.sigmoid(o_g) * jnp.tanh(c)

    h_out_ref[...] = h.astype(h_out_ref.dtype)
    c_out_ref[...] = c.astype(c_out_ref.dtype)


def _pad_gate_params(weight, bias, H, Hp):
    """Repack (2H,5H)/(5H,) params into (2Hp,5Hp)/(1,5Hp) with zero padding.

    Layout: input rows [0:H] -> [0:H], [H:2H] -> [Hp:Hp+H]; per-gate output
    columns [g*H:(g+1)*H] -> [g*Hp:g*Hp+H].  All padded rows/cols are zero, so
    padded hidden channels produce exactly-zero gates / outputs.
    """
    if Hp == H:
        return weight, bias.reshape(1, 5 * H)
    wp = jnp.zeros((2 * Hp, 5 * Hp), weight.dtype)
    bp = jnp.zeros((5 * Hp,), bias.dtype)
    for g in range(5):
        wp = wp.at[0:H, g * Hp:g * Hp + H].set(weight[0:H, g * H:(g + 1) * H])
        wp = wp.at[Hp:Hp + H, g * Hp:g * Hp + H].set(
            weight[H:2 * H, g * H:(g + 1) * H])
        bp = bp.at[g * Hp:g * Hp + H].set(bias[g * H:(g + 1) * H])
    return wp, bp.reshape(1, 5 * Hp)


def _choose_row_tile(N, Hp, requested):
    """Largest row tile (multiple of 8, <= requested) fitting a ~48MiB budget."""
    tm = _round_up(min(requested, _round_up(N, 8)), 8)
    weight_bytes = 2 * (2 * Hp) * (5 * Hp) * 4 + 2 * (5 * Hp) * 4
    budget = 48 * (1 << 20) - weight_bytes
    # 6 row tiles (4 in + 2 out) double-buffered + the (tm, 5Hp) matmul temp.
    per_row_bytes = (6 * 2 * Hp + 5 * Hp) * 4
    max_tm = max(8, (budget // per_row_bytes) // 8 * 8) if budget > 0 else 8
    return max(8, min(tm, max_tm))


def binary_tree_lstm_layer(l, r, weight, bias, *, row_tile=256):
    """Pallas implementation of BinaryTreeLSTMLayer.forward (composition_ln=False).

    Args:
      l: (hl, cl) tuple, each of shape (B, L, H) float32.
      r: (hr, cr) tuple, each of shape (B, L, H) float32.
      weight: (2H, 5H) comp_linear weight (already transposed, x @ W + b).
      bias:   (5H,)   comp_linear bias.
      row_tile: max rows (B*L) per grid step.
    Returns:
      (h, c), each of shape (B, L, H) float32.
    """
    hl, cl = l
    hr, cr = r
    B, L, H = hl.shape
    N = B * L
    assert weight.shape == (2 * H, 5 * H)
    assert bias.shape == (5 * H,)

    # Lane-align the hidden dim (multiple of 128) and pick an effective row tile.
    Hp = _round_up(H, 128)
    tm = _choose_row_tile(N, Hp, row_tile)
    Np = _round_up(N, tm)

    def prep(x):
        x2 = x.reshape(N, H)
        if Hp != H:
            x2 = jnp.pad(x2, ((0, 0), (0, Hp - H)))
        if Np != N:
            x2 = jnp.pad(x2, ((0, Np - N), (0, 0)))
        return x2

    hl2, hr2, cl2, cr2 = prep(hl), prep(hr), prep(cl), prep(cr)
    wp, bp = _pad_gate_params(weight, bias, H, Hp)

    row_spec = pl.BlockSpec((tm, Hp), lambda i: (i, 0))
    grid = (Np // tm,)

    # Scoped-VMEM budget: (4 in + 2 out) double-buffered row tiles
    # + resident weight/bias (worst case double-buffered), with headroom.
    tile_bytes = tm * Hp * 4
    required = (6 * 2 * tile_bytes
                + 2 * (2 * Hp) * (5 * Hp) * 4
                + 2 * (5 * Hp) * 4
                + tm * 5 * Hp * 4)
    vmem_limit = int(min(100 * (1 << 20),
                         max(int(required * 1.5) + (1 << 20), 16 * (1 << 20))))

    h_flat, c_flat = pl.pallas_call(
        functools.partial(_tree_lstm_kernel, hidden_dim=Hp),
        out_shape=(
            jax.ShapeDtypeStruct((Np, Hp), hl.dtype),
            jax.ShapeDtypeStruct((Np, Hp), hl.dtype),
        ),
        grid_spec=pltpu.PrefetchScalarGridSpec(
            num_scalar_prefetch=0,
            grid=grid,
            in_specs=[
                row_spec,                                          # hl
                row_spec,                                          # hr
                row_spec,                                          # cl
                row_spec,                                          # cr
                pl.BlockSpec((2 * Hp, 5 * Hp), lambda i: (0, 0)),  # W (resident)
                pl.BlockSpec((1, 5 * Hp), lambda i: (0, 0)),       # b (resident)
            ],
            out_specs=(row_spec, row_spec),
        ),
        compiler_params=pltpu.CompilerParams(
            dimension_semantics=("parallel",),
            vmem_limit_bytes=vmem_limit),
    )(hl2, hr2, cl2, cr2, wp, bp)

    h = h_flat[:N, :H].reshape(B, L, H)
    c = c_flat[:N, :H].reshape(B, L, H)
    return h, c


def _reference(l, r, weight, bias):
    """Pure-JAX reference of the PyTorch forward."""
    hl, cl = l
    hr, cr = r
    hlr = jnp.concatenate([hl, hr], axis=2)
    v = jnp.einsum("blk,ko->blo", hlr, weight) + bias
    i, fl, fr, u, o = jnp.split(v, 5, axis=2)
    c = (cl * jax.nn.sigmoid(fl + 1.0)
         + cr * jax.nn.sigmoid(fr + 1.0)
         + jnp.tanh(u) * jax.nn.sigmoid(i))
    h = jax.nn.sigmoid(o) * jnp.tanh(c)
    return h, c


if __name__ == "__main__":
    B, L, H = 2, 8, 32

    key = jax.random.PRNGKey(0)
    k_hl, k_cl, k_hr, k_cr, k_w, k_b = jax.random.split(key, 6)

    hl = jax.random.normal(k_hl, (B, L, H), dtype=jnp.float32)
    cl = jax.random.normal(k_cl, (B, L, H), dtype=jnp.float32)
    hr = jax.random.normal(k_hr, (B, L, H), dtype=jnp.float32)
    cr = jax.random.normal(k_cr, (B, L, H), dtype=jnp.float32)

    # comp_linear: nn.Linear(in=2H, out=5H). Deterministic synthetic init.
    bound = 1.0 / jnp.sqrt(2.0 * H)
    weight = jax.random.uniform(k_w, (2 * H, 5 * H), jnp.float32, -bound, bound)
    bias = jax.random.uniform(k_b, (5 * H,), jnp.float32, -bound, bound)

    h, c = binary_tree_lstm_layer((hl, cl), (hr, cr), weight, bias)
    jax.block_until_ready((h, c))

    h_ref, c_ref = _reference((hl, cl), (hr, cr), weight, bias)
    assert jnp.allclose(h, h_ref, atol=1e-5, rtol=1e-5), "h mismatch"
    assert jnp.allclose(c, c_ref, atol=1e-5, rtol=1e-5), "c mismatch"

    print("KERNEL_OK")
</pallas_src>

<mosaic_0001>
module attributes {stable_mosaic.version = 11 : i64} {
  func.func @_tree_lstm_kernel(%arg0: i32, %arg1: memref<16x128xf32, #tpu.memory_space<vmem>>, %arg2: memref<16x128xf32, #tpu.memory_space<vmem>>, %arg3: memref<16x128xf32, #tpu.memory_space<vmem>>, %arg4: memref<16x128xf32, #tpu.memory_space<vmem>>, %arg5: memref<256x640xf32, #tpu.memory_space<vmem>>, %arg6: memref<1x640xf32, #tpu.memory_space<vmem>>, %arg7: memref<16x128xf32, #tpu.memory_space<vmem>>, %arg8: memref<16x128xf32, #tpu.memory_space<vmem>>) attributes {dimension_semantics = [#tpu.dimension_semantics<parallel>], iteration_bounds = array<i64: 1>, scalar_prefetch = 0 : i64, scratch_operands = 0 : i64, tpu.core_type = #tpu.core_type<tc>, window_params = [{transform_indices = @transform_0, window_bounds = array<i64: 16, 128>}, {transform_indices = @transform_1, window_bounds = array<i64: 16, 128>}, {transform_indices = @transform_2, window_bounds = array<i64: 16, 128>}, {transform_indices = @transform_3, window_bounds = array<i64: 16, 128>}, {pipeline_mode = #tpu.pipeline_mode<synchronous>, transform_indices = @transform_4, window_bounds = array<i64: 256, 640>}, {pipeline_mode = #tpu.pipeline_mode<synchronous>, transform_indices = @transform_5, window_bounds = array<i64: 1, 640>}, {transform_indices = @transform_6, window_bounds = array<i64: 16, 128>}, {transform_indices = @transform_7, window_bounds = array<i64: 16, 128>}]} {
    %c0 = arith.constant 0 : index
    %c0_0 = arith.constant 0 : index
    %0 = vector.load %arg1[%c0, %c0_0] : memref<16x128xf32, #tpu.memory_space<vmem>>, vector<16x128xf32>
    %c0_1 = arith.constant 0 : index
    %c0_2 = arith.constant 0 : index
    %1 = vector.load %arg2[%c0_1, %c0_2] : memref<16x128xf32, #tpu.memory_space<vmem>>, vector<16x128xf32>
    %c0_3 = arith.constant 0 : index
    %c0_4 = arith.constant 0 : index
    %2 = vector.load %arg3[%c0_3, %c0_4] : memref<16x128xf32, #tpu.memory_space<vmem>>, vector<16x128xf32>
    %c0_5 = arith.constant 0 : index
    %c0_6 = arith.constant 0 : index
    %3 = vector.load %arg4[%c0_5, %c0_6] : memref<16x128xf32, #tpu.memory_space<vmem>>, vector<16x128xf32>
    %c0_7 = arith.constant 0 : index
    %c0_8 = arith.constant 0 : index
    %4 = vector.load %arg5[%c0_7, %c0_8] : memref<256x640xf32, #tpu.memory_space<vmem>>, vector<128x640xf32>
    %cst = arith.constant dense<0.000000e+00> : vector<16x640xf32>
    %5 = tpu.matmul %0, %4, %cst {dimension_numbers = #tpu.dot_dimension_numbers<[1], [0], [0], [1], [0, 0, 1, 1], [], []>} : vector<16x128xf32>, vector<128x640xf32>, vector<16x640xf32> -> vector<16x640xf32>
    %c128 = arith.constant 128 : index
    %c0_9 = arith.constant 0 : index
    %6 = vector.load %arg5[%c128, %c0_9] : memref<256x640xf32, #tpu.memory_space<vmem>>, vector<128x640xf32>
    %cst_10 = arith.constant dense<0.000000e+00> : vector<16x640xf32>
    %7 = tpu.matmul %1, %6, %cst_10 {dimension_numbers = #tpu.dot_dimension_numbers<[1], [0], [0], [1], [0, 0, 1, 1], [], []>} : vector<16x128xf32>, vector<128x640xf32>, vector<16x640xf32> -> vector<16x640xf32>
    %8 = arith.addf %5, %7 : vector<16x640xf32>
    %c0_11 = arith.constant 0 : index
    %c0_12 = arith.constant 0 : index
    %9 = vector.load %arg6[%c0_11, %c0_12] : memref<1x640xf32, #tpu.memory_space<vmem>>, vector<1x640xf32>
    %10 = vector.broadcast %9 : vector<1x640xf32> to vector<16x640xf32>
    %11 = arith.addf %8, %10 : vector<16x640xf32>
    %12 = vector.extract_strided_slice %11 {offsets = [0, 0], sizes = [16, 128], strides = [1, 1]} : vector<16x640xf32> to vector<16x128xf32>
    %13 = vector.extract_strided_slice %11 {offsets = [0, 128], sizes = [16, 128], strides = [1, 1]} : vector<16x640xf32> to vector<16x128xf32>
    %14 = vector.extract_strided_slice %11 {offsets = [0, 256], sizes = [16, 128], strides = [1, 1]} : vector<16x640xf32> to vector<16x128xf32>
    %15 = vector.extract_strided_slice %11 {offsets = [0, 384], sizes = [16, 128], strides = [1, 1]} : vector<16x640xf32> to vector<16x128xf32>
    %16 = vector.extract_strided_slice %11 {offsets = [0, 512], sizes = [16, 128], strides = [1, 1]} : vector<16x640xf32> to vector<16x128xf32>
    %cst_13 = arith.constant 1.000000e+00 : f32
    %17 = vector.broadcast %cst_13 : f32 to vector<16x128xf32>
    %18 = arith.addf %13, %17 : vector<16x128xf32>
    %19 = arith.negf %18 : vector<16x128xf32>
    %20 = math.exp %19 : vector<16x128xf32>
    %cst_14 = arith.constant 1.000000e+00 : f32
    %21 = vector.broadcast %cst_14 : f32 to vector<16x128xf32>
    %22 = arith.addf %21, %20 : vector<16x128xf32>
    %23 = arith.divf %21, %22 : vector<16x128xf32>
    %24 = arith.mulf %2, %23 : vector<16x128xf32>
    %cst_15 = arith.constant 1.000000e+00 : f32
    %25 = vector.broadcast %cst_15 : f32 to vector<16x128xf32>
    %26 = arith.addf %14, %25 : vector<16x128xf32>
    %27 = arith.negf %26 : vector<16x128xf32>
    %28 = math.exp %27 : vector<16x128xf32>
    %cst_16 = arith.constant 1.000000e+00 : f32
    %29 = vector.broadcast %cst_16 : f32 to vector<16x128xf32>
    %30 = arith.addf %29, %28 : vector<16x128xf32>
    %31 = arith.divf %29, %30 : vector<16x128xf32>
    %32 = arith.mulf %3, %31 : vector<16x128xf32>
    %33 = arith.addf %24, %32 : vector<16x128xf32>
    %34 = math.tanh %15 : vector<16x128xf32>
    %35 = arith.negf %12 : vector<16x128xf32>
    %36 = math.exp %35 : vector<16x128xf32>
    %cst_17 = arith.constant 1.000000e+00 : f32
    %37 = vector.broadcast %cst_17 : f32 to vector<16x128xf32>
    %38 = arith.addf %37, %36 : vector<16x128xf32>
    %39 = arith.divf %37, %38 : vector<16x128xf32>
    %40 = arith.mulf %34, %39 : vector<16x128xf32>
    %41 = arith.addf %33, %40 : vector<16x128xf32>
    %42 = arith.negf %16 : vector<16x128xf32>
    %43 = math.exp %42 : vector<16x128xf32>
    %cst_18 = arith.constant 1.000000e+00 : f32
    %44 = vector.broadcast %cst_18 : f32 to vector<16x128xf32>
    %45 = arith.addf %44, %43 : vector<16x128xf32>
    %46 = arith.divf %44, %45 : vector<16x128xf32>
    %47 = math.tanh %41 : vector<16x128xf32>
    %48 = arith.mulf %46, %47 : vector<16x128xf32>
    %c0_19 = arith.constant 0 : index
    %c0_20 = arith.constant 0 : index
    %49 = vector.load %arg7[%c0_19, %c0_20] : memref<16x128xf32, #tpu.memory_space<vmem>>, vector<16x128xf32>
    tpu.vector_store %arg7[%c0_19, %c0_20], %48 {strides = array<i32>} : memref<16x128xf32, #tpu.memory_space<vmem>>, vector<16x128xf32>,
    %c0_21 = arith.constant 0 : index
    %c0_22 = arith.constant 0 : index
    %50 = vector.load %arg8[%c0_21, %c0_22] : memref<16x128xf32, #tpu.memory_space<vmem>>, vector<16x128xf32>
    tpu.vector_store %arg8[%c0_21, %c0_22], %41 {strides = array<i32>} : memref<16x128xf32, #tpu.memory_space<vmem>>, vector<16x128xf32>,
    return
  }
  func.func @transform_0(%arg0: i32) -> (i32, i32) {
    %c0_i32 = arith.constant 0 : i32
    %c0_i32_0 = arith.constant 0 : i32
    return %arg0, %c0_i32 : i32, i32
  }
  func.func @transform_1(%arg0: i32) -> (i32, i32) {
    %c0_i32 = arith.constant 0 : i32
    %c0_i32_0 = arith.constant 0 : i32
    return %arg0, %c0_i32 : i32, i32
  }
  func.func @transform_2(%arg0: i32) -> (i32, i32) {
    %c0_i32 = arith.constant 0 : i32
    %c0_i32_0 = arith.constant 0 : i32
    return %arg0, %c0_i32 : i32, i32
  }
  func.func @transform_3(%arg0: i32) -> (i32, i32) {
    %c0_i32 = arith.constant 0 : i32
    %c0_i32_0 = arith.constant 0 : i32
    return %arg0, %c0_i32 : i32, i32
  }
  func.func @transform_4(%arg0: i32) -> (i32, i32) {
    %c0_i32 = arith.constant 0 : i32
    %c0_i32_0 = arith.constant 0 : i32
    %c0_i32_1 = arith.constant 0 : i32
    return %c0_i32, %c0_i32_0 : i32, i32
  }
  func.func @transform_5(%arg0: i32) -> (i32, i32) {
    %c0_i32 = arith.constant 0 : i32
    %c0_i32_0 = arith.constant 0 : i32
    %c0_i32_1 = arith.constant 0 : i32
    return %c0_i32, %c0_i32_0 : i32, i32
  }
  func.func @transform_6(%arg0: i32) -> (i32, i32) {
    %c0_i32 = arith.constant 0 : i32
    %c0_i32_0 = arith.constant 0 : i32
    return %arg0, %c0_i32 : i32, i32
  }
  func.func @transform_7(%arg0: i32) -> (i32, i32) {
    %c0_i32 = arith.constant 0 : i32
    %c0_i32_0 = arith.constant 0 : i32
    return %arg0, %c0_i32 : i32, i32
  }
}

</mosaic_0001>

<llo_original>
// kernel: tpu_custom_call.1
$region0: #{tpu_custom_call.1}
  #allocation0 [shape = 'u32[]', space=smem, size = 0x4, offset = 0x4, fixed_abs, tag = 'smem constant byte address 0x4 - core index']
  #allocation1 [shape = 'u32[144,128]{1,0:T(1,128)}', space=vmem, size = 0x12000, scoped, tag = 'internal scratch']
  %s0 = inlined_call_operand.hbm [shape: f32[16,128], index: 0, kind: input, shape index: {}]
  %s1 = inlined_call_operand.hbm [shape: f32[16,128], index: 1, kind: input, shape index: {}]
  %s2 = inlined_call_operand.hbm [shape: f32[16,128], index: 2, kind: input, shape index: {}]
  %s3 = inlined_call_operand.hbm [shape: f32[16,128], index: 3, kind: input, shape index: {}]
  %s4 = inlined_call_operand.hbm [shape: f32[256,640], index: 4, kind: input, shape index: {}]
  %s5 = inlined_call_operand.vmem [shape: f32[1,640], index: 5, kind: input, shape index: {}]
  %s6 = inlined_call_operand.hbm [shape: f32[16,128], index: 6, kind: output, shape index: {0}]
  %s7 = inlined_call_operand.hbm [shape: f32[16,128], index: 7, kind: output, shape index: {1}]
  %8 = xla_tuple %s6, %s7
  %s9 = sld [smem:[#allocation0]]
  $region62: #{tpu_custom_call.1} parent=0
    _
  %s11 = ssub.s32 1, %s9
  %s12 = scalar_select 0, %s11, %s9
  $region1: #{tpu_custom_call.1} parent=0
    #allocation2 [shape = 'u8[8192]{0}', space=vmem, size = 0x2000, scoped, tag = 'input window, operand 0, single buffered']
    #allocation3 [shape = 's32[1]{0}', space=sflag, size = 0x4, scoped, tag = 'scoped memory for tpu_custom_call.1']
    #allocation4 [shape = 's32[1]{0}', space=sflag, size = 0x4, scoped, tag = 'scoped memory for tpu_custom_call.1']
    #allocation5 [shape = 'u8[8192]{0}', space=vmem, size = 0x2000, scoped, tag = 'input window, operand 1, single buffered']
    #allocation6 [shape = 's32[1]{0}', space=sflag, size = 0x4, scoped, tag = 'scoped memory for tpu_custom_call.1']
    #allocation7 [shape = 'u8[8192]{0}', space=vmem, size = 0x2000, scoped, tag = 'input window, operand 2, single buffered']
    #allocation8 [shape = 'u8[8192]{0}', space=vmem, size = 0x2000, scoped, tag = 'input window, operand 3, single buffered']
    #allocation9 [shape = 's32[1]{0}', space=sflag, size = 0x4, scoped, tag = 'scoped memory for tpu_custom_call.1']
    #allocation10 [shape = 'u8[655360]{0}', space=vmem, size = 0xa0000, scoped, tag = 'input window, operand 4, single buffered']
    #allocation11 [shape = 'u8[8192]{0}', space=vmem, size = 0x2000, scoped, tag = 'output window, operand 0, single buffered']
    #allocation12 [shape = 'u8[8192]{0}', space=vmem, size = 0x2000, scoped, tag = 'output window, operand 1, single buffered']
    #allocation13 [shape = 's32[1]{0}', space=sflag, size = 0x4, scoped, tag = 'scoped memory for tpu_custom_call.1']
    %13 = vsyncpa [#allocation3], 0
    %14 = vsyncpa [#allocation6], 0
    %15 = vsyncpa [#allocation9], 0
    %16 = vsyncpa [#allocation4], 0
    %17 = vsyncpa [#allocation13], 0
    // Predicated region
    $region2: #{tpu_custom_call.1} parent=1 // pred_check
      _
    $region3: #{tpu_custom_call.1} parent=1 // pred_check_branch
      %19 = sbr.rel (0) target = $region5
    $region4: #{tpu_custom_call.1} parent=1 // pred_region
      %s21 = ssub.s32 256, 256
      %22 = vsyncadd [#allocation3], %s21
      %s23 = sshll.u32 [#allocation2], 4
      %s24 = int_to_ptr.vmem [resolvable:$true] %s23
      %29 = dma.hbm_to_vmem [thread:$0]  %s0, 256, %s24, [#allocation3], 128, 128, 8
    $region5: #{tpu_custom_call.1} parent=1 // pred_fallthru
      _
    // Predicated region
    $region6: #{tpu_custom_call.1} parent=1 // pred_check
      _
    $region7: #{tpu_custom_call.1} parent=1 // pred_check_branch
      %31 = sbr.rel (0) target = $region9
    $region8: #{tpu_custom_call.1} parent=1 // pred_region
      %s33 = ssub.s32 256, 256
      %34 = vsyncadd [#allocation6], %s33
      %s35 = sshll.u32 [#allocation5], 4
      %s36 = int_to_ptr.vmem [resolvable:$true] %s35
      %41 = dma.hbm_to_vmem [thread:$0]  %s1, 256, %s36, [#allocation6], 128, 128, 8
    $region9: #{tpu_custom_call.1} parent=1 // pred_fallthru
      _
    // Predicated region
    $region10: #{tpu_custom_call.1} parent=1 // pred_check
      _
    $region11: #{tpu_custom_call.1} parent=1 // pred_check_branch
      %43 = sbr.rel (0) target = $region13
    $region12: #{tpu_custom_call.1} parent=1 // pred_region
      %s45 = ssub.s32 256, 256
      %46 = vsyncadd [#allocation6], %s45
      %s47 = sshll.u32 [#allocation7], 4
      %s48 = int_to_ptr.vmem [resolvable:$true] %s47
      %53 = dma.hbm_to_vmem [thread:$0]  %s2, 256, %s48, [#allocation6], 128, 128, 8
    $region13: #{tpu_custom_call.1} parent=1 // pred_fallthru
      _
    // Predicated region
    $region14: #{tpu_custom_call.1} parent=1 // pred_check
      _
    $region15: #{tpu_custom_call.1} parent=1 // pred_check_branch
      %55 = sbr.rel (0) target = $region17
    $region16: #{tpu_custom_call.1} parent=1 // pred_region
      %s57 = ssub.s32 256, 256
      %58 = vsyncadd [#allocation9], %s57
      %s59 = sshll.u32 [#allocation8], 4
      %s60 = int_to_ptr.vmem [resolvable:$true] %s59
      %65 = dma.hbm_to_vmem [thread:$0]  %s3, 256, %s60, [#allocation9], 128, 128, 8
    $region17: #{tpu_custom_call.1} parent=1 // pred_fallthru
      _
    // Predicated region
    $region18: #{tpu_custom_call.1} parent=1 // pred_check
      _
    $region19: #{tpu_custom_call.1} parent=1 // pred_check_branch
      %67 = sbr.rel (0) target = $region21
    $region20: #{tpu_custom_call.1} parent=1 // pred_region
      %s69 = ssub.s32 20480, 20480
      %70 = vsyncadd [#allocation9], %s69
      %s71 = sshll.u32 [#allocation10], 4
      %s72 = int_to_ptr.vmem [resolvable:$true] %s71
      %77 = dma.hbm_to_vmem [thread:$0]  %s4, 20480, %s72, [#allocation9], 640, 640, 40
    $region21: #{tpu_custom_call.1} parent=1 // pred_fallthru
      _
    // Predicated region
    $region22: #{tpu_custom_call.1} parent=1 // pred_check
      _
    $region23: #{tpu_custom_call.1} parent=1 // pred_check_branch
      %79 = sbr.rel (0) target = $region25
    $region24: #{tpu_custom_call.1} parent=1 // pred_region
      _
    $region25: #{tpu_custom_call.1} parent=1 // pred_fallthru
      _
    // Predicated region
    $region26: #{tpu_custom_call.1} parent=1 // pred_check
      _
    $region27: #{tpu_custom_call.1} parent=1 // pred_check_branch
      %81 = sbr.rel (0) target = $region29
    $region28: #{tpu_custom_call.1} parent=1 // pred_region
      %82 = dma.done [#allocation3], 256
    $region29: #{tpu_custom_call.1} parent=1 // pred_fallthru
      _
    // Predicated region
    $region30: #{tpu_custom_call.1} parent=1 // pred_check
      _
    $region31: #{tpu_custom_call.1} parent=1 // pred_check_branch
      %84 = sbr.rel (0) target = $region33
    $region32: #{tpu_custom_call.1} parent=1 // pred_region
      %85 = dma.done [#allocation6], 256
    $region33: #{tpu_custom_call.1} parent=1 // pred_fallthru
      _
    // Predicated region
    $region34: #{tpu_custom_call.1} parent=1 // pred_check
      _
    $region35: #{tpu_custom_call.1} parent=1 // pred_check_branch
      %87 = sbr.rel (0) target = $region37
    $region36: #{tpu_custom_call.1} parent=1 // pred_region
      %88 = dma.done [#allocation6], 256
    $region37: #{tpu_custom_call.1} parent=1 // pred_fallthru
      _
    // Predicated region
    $region38: #{tpu_custom_call.1} parent=1 // pred_check
      _
    $region39: #{tpu_custom_call.1} parent=1 // pred_check_branch
      %90 = sbr.rel (0) target = $region41
    $region40: #{tpu_custom_call.1} parent=1 // pred_region
      %91 = dma.done [#allocation9], 256
    $region41: #{tpu_custom_call.1} parent=1 // pred_fallthru
      _
    // Predicated region
    $region42: #{tpu_custom_call.1} parent=1 // pred_check
      _
    $region43: #{tpu_custom_call.1} parent=1 // pred_check_branch
      %93 = sbr.rel (0) target = $region45
    $region44: #{tpu_custom_call.1} parent=1 // pred_region
      %94 = dma.done [#allocation9], 20480
    $region45: #{tpu_custom_call.1} parent=1 // pred_fallthru
      _
    %v95 = vld [vmem:[#allocation2] sm:$0xff]
    %v96 = vld [vmem:[#allocation2 + $0x8] sm:$0xff]
    %v97 = vld [vmem:[#allocation5] sm:$0xff]
    %v98 = vld [vmem:[#allocation5 + $0x8] sm:$0xff]
    %v99 = vld [vmem:[#allocation7] sm:$0xff]
    %v100 = vld [vmem:[#allocation7 + $0x8] sm:$0xff]
    %v101 = vld [vmem:[#allocation8] sm:$0xff]
    %v102 = vld [vmem:[#allocation8 + $0x8] sm:$0xff]
    %v103 = vld [vmem:[#allocation10] sm:$0xff]
    %v104 = vld [vmem:[#allocation10 + $0x8] sm:$0xff]
    %v105 = vld [vmem:[#allocation10 + $0x10] sm:$0xff]
    %v106 = vld [vmem:[#allocation10 + $0x18] sm:$0xff]
    %v107 = vld [vmem:[#allocation10 + $0x20] sm:$0xff]
    %v108 = vld [vmem:[#allocation10 + $0x28] sm:$0xff]
    %v109 = vld [vmem:[#allocation10 + $0x30] sm:$0xff]
    %v110 = vld [vmem:[#allocation10 + $0x38] sm:$0xff]
    %v111 = vld [vmem:[#allocation10 + $0x40] sm:$0xff]
    %v112 = vld [vmem:[#allocation10 + $0x48] sm:$0xff]
    %v113 = vld [vmem:[#allocation10 + $0x50] sm:$0xff]
    %v114 = vld [vmem:[#allocation10 + $0x58] sm:$0xff]
    %v115 = vld [vmem:[#allocation10 + $0x60] sm:$0xff]
    %v116 = vld [vmem:[#allocation10 + $0x68] sm:$0xff]
    %v117 = vld [vmem:[#allocation10 + $0x70] sm:$0xff]
    %v118 = vld [vmem:[#allocation10 + $0x78] sm:$0xff]
    %v119 = vld [vmem:[#allocation10 + $0x80] sm:$0xff]
    %v120 = vld [vmem:[#allocation10 + $0x88] sm:$0xff]
    %v121 = vld [vmem:[#allocation10 + $0x90] sm:$0xff]
    %v122 = vld [vmem:[#allocation10 + $0x98] sm:$0xff]
    %v123 = vld [vmem:[#allocation10 + $0xa0] sm:$0xff]
    %v124 = vld [vmem:[#allocation10 + $0xa8] sm:$0xff]
    %v125 = vld [vmem:[#allocation10 + $0xb0] sm:$0xff]
    %v126 = vld [vmem:[#allocation10 + $0xb8] sm:$0xff]
    %v127 = vld [vmem:[#allocation10 + $0xc0] sm:$0xff]
    %v128 = vld [vmem:[#allocation10 + $0xc8] sm:$0xff]
    %v129 = vld [vmem:[#allocation10 + $0xd0] sm:$0xff]
    %v130 = vld [vmem:[#allocation10 + $0xd8] sm:$0xff]
    %v131 = vld [vmem:[#allocation10 + $0xe0] sm:$0xff]
    %v132 = vld [vmem:[#allocation10 + $0xe8] sm:$0xff]
    %v133 = vld [vmem:[#allocation10 + $0xf0] sm:$0xff]
    %v134 = vld [vmem:[#allocation10 + $0xf8] sm:$0xff]
    %v135 = vld [vmem:[#allocation10 + $0x100] sm:$0xff]
    %v136 = vld [vmem:[#allocation10 + $0x108] sm:$0xff]
    %v137 = vld [vmem:[#allocation10 + $0x110] sm:$0xff]
    %v138 = vld [vmem:[#allocation10 + $0x118] sm:$0xff]
    %v139 = vld [vmem:[#allocation10 + $0x120] sm:$0xff]
    %v140 = vld [vmem:[#allocation10 + $0x128] sm:$0xff]
    %v141 = vld [vmem:[#allocation10 + $0x130] sm:$0xff]
    %v142 = vld [vmem:[#allocation10 + $0x138] sm:$0xff]
    %v143 = vld [vmem:[#allocation10 + $0x140] sm:$0xff]
    %v144 = vld [vmem:[#allocation10 + $0x148] sm:$0xff]
    %v145 = vld [vmem:[#allocation10 + $0x150] sm:$0xff]
    %v146 = vld [vmem:[#allocation10 + $0x158] sm:$0xff]
    %v147 = vld [vmem:[#allocation10 + $0x160] sm:$0xff]
    %v148 = vld [vmem:[#allocation10 + $0x168] sm:$0xff]
    %v149 = vld [vmem:[#allocation10 + $0x170] sm:$0xff]
    %v150 = vld [vmem:[#allocation10 + $0x178] sm:$0xff]
    %v151 = vld [vmem:[#allocation10 + $0x180] sm:$0xff]
    %v152 = vld [vmem:[#allocation10 + $0x188] sm:$0xff]
    %v153 = vld [vmem:[#allocation10 + $0x190] sm:$0xff]
    %v154 = vld [vmem:[#allocation10 + $0x198] sm:$0xff]
    %v155 = vld [vmem:[#allocation10 + $0x1a0] sm:$0xff]
    %v156 = vld [vmem:[#allocation10 + $0x1a8] sm:$0xff]
    %v157 = vld [vmem:[#allocation10 + $0x1b0] sm:$0xff]
    %v158 = vld [vmem:[#allocation10 + $0x1b8] sm:$0xff]
    %v159 = vld [vmem:[#allocation10 + $0x1c0] sm:$0xff]
    %v160 = vld [vmem:[#allocation10 + $0x1c8] sm:$0xff]
    %v161 = vld [vmem:[#allocation10 + $0x1d0] sm:$0xff]
    %v162 = vld [vmem:[#allocation10 + $0x1d8] sm:$0xff]
    %v163 = vld [vmem:[#allocation10 + $0x1e0] sm:$0xff]
    %v164 = vld [vmem:[#allocation10 + $0x1e8] sm:$0xff]
    %v165 = vld [vmem:[#allocation10 + $0x1f0] sm:$0xff]
    %v166 = vld [vmem:[#allocation10 + $0x1f8] sm:$0xff]
    %v167 = vld [vmem:[#allocation10 + $0x200] sm:$0xff]
    %v168 = vld [vmem:[#allocation10 + $0x208] sm:$0xff]
    %v169 = vld [vmem:[#allocation10 + $0x210] sm:$0xff]
    %v170 = vld [vmem:[#allocation10 + $0x218] sm:$0xff]
    %v171 = vld [vmem:[#allocation10 + $0x220] sm:$0xff]
    %v172 = vld [vmem:[#allocation10 + $0x228] sm:$0xff]
    %v173 = vld [vmem:[#allocation10 + $0x230] sm:$0xff]
    %v174 = vld [vmem:[#allocation10 + $0x238] sm:$0xff]
    %v175 = vld [vmem:[#allocation10 + $0x240] sm:$0xff]
    %v176 = vld [vmem:[#allocation10 + $0x248] sm:$0xff]
    %v177 = vld [vmem:[#allocation10 + $0x250] sm:$0xff]
    %v178 = vld [vmem:[#allocation10 + $0x258] sm:$0xff]
    %v179 = vld [vmem:[#allocation10 + $0x260] sm:$0xff]
    %v180 = vld [vmem:[#allocation10 + $0x268] sm:$0xff]
    %v181 = vld [vmem:[#allocation10 + $0x270] sm:$0xff]
    %v182 = vld [vmem:[#allocation10 + $0x278] sm:$0xff]
    %v183 = vld [vmem:[#allocation10 + $0x280] sm:$0xff]
    %v184 = vld [vmem:[#allocation10 + $0x288] sm:$0xff]
    %v185 = vld [vmem:[#allocation10 + $0x290] sm:$0xff]
    %v186 = vld [vmem:[#allocation10 + $0x298] sm:$0xff]
    %v187 = vld [vmem:[#allocation10 + $0x2a0] sm:$0xff]
    %v188 = vld [vmem:[#allocation10 + $0x2a8] sm:$0xff]
    %v189 = vld [vmem:[#allocation10 + $0x2b0] sm:$0xff]
    %v190 = vld [vmem:[#allocation10 + $0x2b8] sm:$0xff]
    %v191 = vld [vmem:[#allocation10 + $0x2c0] sm:$0xff]
    %v192 = vld [vmem:[#allocation10 + $0x2c8] sm:$0xff]
    %v193 = vld [vmem:[#allocation10 + $0x2d0] sm:$0xff]
    %v194 = vld [vmem:[#allocation10 + $0x2d8] sm:$0xff]
    %v195 = vld [vmem:[#allocation10 + $0x2e0] sm:$0xff]
    %v196 = vld [vmem:[#allocation10 + $0x2e8] sm:$0xff]
    %v197 = vld [vmem:[#allocation10 + $0x2f0] sm:$0xff]
    %v198 = vld [vmem:[#allocation10 + $0x2f8] sm:$0xff]
    %v199 = vld [vmem:[#allocation10 + $0x300] sm:$0xff]
    %v200 = vld [vmem:[#allocation10 + $0x308] sm:$0xff]
    %v201 = vld [vmem:[#allocation10 + $0x310] sm:$0xff]
    %v202 = vld [vmem:[#allocation10 + $0x318] sm:$0xff]
    %v203 = vld [vmem:[#allocation10 + $0x320] sm:$0xff]
    %v204 = vld [vmem:[#allocation10 + $0x328] sm:$0xff]
    %v205 = vld [vmem:[#allocation10 + $0x330] sm:$0xff]
    %v206 = vld [vmem:[#allocation10 + $0x338] sm:$0xff]
    %v207 = vld [vmem:[#allocation10 + $0x340] sm:$0xff]
    %v208 = vld [vmem:[#allocation10 + $0x348] sm:$0xff]
    %v209 = vld [vmem:[#allocation10 + $0x350] sm:$0xff]
    %v210 = vld [vmem:[#allocation10 + $0x358] sm:$0xff]
    %v211 = vld [vmem:[#allocation10 + $0x360] sm:$0xff]
    %v212 = vld [vmem:[#allocation10 + $0x368] sm:$0xff]
    %v213 = vld [vmem:[#allocation10 + $0x370] sm:$0xff]
    %v214 = vld [vmem:[#allocation10 + $0x378] sm:$0xff]
    %v215 = vld [vmem:[#allocation10 + $0x380] sm:$0xff]
    %v216 = vld [vmem:[#allocation10 + $0x388] sm:$0xff]
    %v217 = vld [vmem:[#allocation10 + $0x390] sm:$0xff]
    %v218 = vld [vmem:[#allocation10 + $0x398] sm:$0xff]
    %v219 = vld [vmem:[#allocation10 + $0x3a0] sm:$0xff]
    %v220 = vld [vmem:[#allocation10 + $0x3a8] sm:$0xff]
    %v221 = vld [vmem:[#allocation10 + $0x3b0] sm:$0xff]
    %v222 = vld [vmem:[#allocation10 + $0x3b8] sm:$0xff]
    %v223 = vld [vmem:[#allocation10 + $0x3c0] sm:$0xff]
    %v224 = vld [vmem:[#allocation10 + $0x3c8] sm:$0xff]
    %v225 = vld [vmem:[#allocation10 + $0x3d0] sm:$0xff]
    %v226 = vld [vmem:[#allocation10 + $0x3d8] sm:$0xff]
    %v227 = vld [vmem:[#allocation10 + $0x3e0] sm:$0xff]
    %v228 = vld [vmem:[#allocation10 + $0x3e8] sm:$0xff]
    %v229 = vld [vmem:[#allocation10 + $0x3f0] sm:$0xff]
    %v230 = vld [vmem:[#allocation10 + $0x3f8] sm:$0xff]
    %v231 = vld [vmem:[#allocation10 + $0x400] sm:$0xff]
    %v232 = vld [vmem:[#allocation10 + $0x408] sm:$0xff]
    %v233 = vld [vmem:[#allocation10 + $0x410] sm:$0xff]
    %v234 = vld [vmem:[#allocation10 + $0x418] sm:$0xff]
    %v235 = vld [vmem:[#allocation10 + $0x420] sm:$0xff]
    %v236 = vld [vmem:[#allocation10 + $0x428] sm:$0xff]
    %v237 = vld [vmem:[#allocation10 + $0x430] sm:$0xff]
    %v238 = vld [vmem:[#allocation10 + $0x438] sm:$0xff]
    %v239 = vld [vmem:[#allocation10 + $0x440] sm:$0xff]
    %v240 = vld [vmem:[#allocation10 + $0x448] sm:$0xff]
    %v241 = vld [vmem:[#allocation10 + $0x450] sm:$0xff]
    %v242 = vld [vmem:[#allocation10 + $0x458] sm:$0xff]
    %v243 = vld [vmem:[#allocation10 + $0x460] sm:$0xff]
    %v244 = vld [vmem:[#allocation10 + $0x468] sm:$0xff]
    %v245 = vld [vmem:[#allocation10 + $0x470] sm:$0xff]
    %v246 = vld [vmem:[#allocation10 + $0x478] sm:$0xff]
    %v247 = vld [vmem:[#allocation10 + $0x480] sm:$0xff]
    %v248 = vld [vmem:[#allocation10 + $0x488] sm:$0xff]
    %v249 = vld [vmem:[#allocation10 + $0x490] sm:$0xff]
    %v250 = vld [vmem:[#allocation10 + $0x498] sm:$0xff]
    %v251 = vld [vmem:[#allocation10 + $0x4a0] sm:$0xff]
    %v252 = vld [vmem:[#allocation10 + $0x4a8] sm:$0xff]
    %v253 = vld [vmem:[#allocation10 + $0x4b0] sm:$0xff]
    %v254 = vld [vmem:[#allocation10 + $0x4b8] sm:$0xff]
    %v255 = vld [vmem:[#allocation10 + $0x4c0] sm:$0xff]
    %v256 = vld [vmem:[#allocation10 + $0x4c8] sm:$0xff]
    %v257 = vld [vmem:[#allocation10 + $0x4d0] sm:$0xff]
    %v258 = vld [vmem:[#allocation10 + $0x4d8] sm:$0xff]
    %v259 = vld [vmem:[#allocation10 + $0x4e0] sm:$0xff]
    %v260 = vld [vmem:[#allocation10 + $0x4e8] sm:$0xff]
    %v261 = vld [vmem:[#allocation10 + $0x4f0] sm:$0xff]
    %v262 = vld [vmem:[#allocation10 + $0x4f8] sm:$0xff]
    %263 = vmatprep.subr.mxu0 %v184
    %264 = vmatpush1.msra.mxu0 %v183
    %265 = vmatprep.subr.mxu0 %v189
    %266 = vmatpush1.msra.mxu0 %v188
    %267 = vmatprep.subr.mxu0 %v194
    %268 = vmatpush1.msra.mxu0 %v193
    %269 = vmatprep.subr.mxu0 %v199
    %270 = vmatpush1.msra.mxu0 %v198
    %271 = vmatprep.subr.mxu0 %v204
    %272 = vmatpush1.msra.mxu0 %v203
    %273 = vmatprep.subr.mxu0 %v209
    %274 = vmatpush1.msra.mxu0 %v208
    %275 = vmatprep.subr.mxu0 %v214
    %276 = vmatpush1.msra.mxu0 %v213
    %277 = vmatprep.subr.mxu0 %v219
    %278 = vmatpush1.msra.mxu0 %v218
    %279 = vmatprep.subr.mxu0 %v224
    %280 = vmatpush1.msra.mxu0 %v223
    %281 = vmatprep.subr.mxu0 %v229
    %282 = vmatpush1.msra.mxu0 %v228
    %283 = vmatprep.subr.mxu0 %v234
    %284 = vmatpush1.msra.mxu0 %v233
    %285 = vmatprep.subr.mxu0 %v239
    %286 = vmatpush1.msra.mxu0 %v238
    %287 = vmatprep.subr.mxu0 %v244
    %288 = vmatpush1.msra.mxu0 %v243
    %289 = vmatprep.subr.mxu0 %v249
    %290 = vmatpush1.msra.mxu0 %v248
    %291 = vmatprep.subr.mxu0 %v254
    %292 = vmatpush1.msra.mxu0 %v253
    %293 = vmatprep.subr.mxu0 %v259
    %294 = vmatpush1.msra.mxu0 %v258
    %295 = vmatprep.subr.mxu0 0.0
    %296 = vmatpush1.msra.mxu0 0.0
    %297 = vmatprep.subr.mxu0 0.0
    %298 = vmatpush1.msra.mxu0 0.0
    %299 = vmatprep.subr.mxu0 0.0
    %300 = vmatpush1.msra.mxu0 0.0
    %301 = vmatprep.subr.mxu0 0.0
    %302 = vmatpush1.msra.mxu0 0.0
    %303 = vmatprep.subr.mxu0 0.0
    %304 = vmatpush1.msra.mxu0 0.0
    %305 = vmatprep.subr.mxu0 0.0
    %306 = vmatpush1.msra.mxu0 0.0
    %307 = vmatprep.subr.mxu0 0.0
    %308 = vmatpush1.msra.mxu0 0.0
    %309 = vmatprep.subr.mxu0 0.0
    %310 = vmatpush1.msra.mxu0 0.0
    %311 = vmatprep.subr.mxu0 0.0
    %312 = vmatpush1.msra.mxu0 0.0
    %313 = vmatprep.subr.mxu0 0.0
    %314 = vmatpush1.msra.mxu0 0.0
    %315 = vmatprep.subr.mxu0 0.0
    %316 = vmatpush1.msra.mxu0 0.0
    %317 = vmatprep.subr.mxu0 0.0
    %318 = vmatpush1.msra.mxu0 0.0
    %319 = vmatprep.subr.mxu0 0.0
    %320 = vmatpush1.msra.mxu0 0.0
    %321 = vmatprep.subr.mxu0 0.0
    %322 = vmatpush1.msra.mxu0 0.0
    %323 = vmatprep.subr.mxu0 0.0
    %324 = vmatpush1.msra.mxu0 0.0
    %325 = vmatprep.subr.mxu0 0.0
    %326 = vmatpush1.msra.mxu0 0.0
    %327 = vmatprep.mubr.f32.mxu0 0.0
    %328 = vmatmul.mubr.f32.gmra.mrb[0].mxu0 %v97
    %v329 = vpop.f32.mrb[0].mxu0
    %v330 = vadd.f32 0.0, %v329
    %v331 = vpop.f32.mrb[0].mxu0
    %v332 = vadd.f32 0.0, %v331
    %333 = vmatprep.mubr.f32.mxu0 0.0
    %334 = vmatmul.mubr.f32.gmra.mrb[0].mxu0 %v98
    %v335 = vpop.f32.mrb[0].mxu0
    %v336 = vadd.f32 0.0, %v335
    %v337 = vpop.f32.mrb[0].mxu0
    %v338 = vadd.f32 0.0, %v337
    %339 = vdwg.mxu0
    %340 = vmatprep.subr.mxu0 %v186
    %341 = vmatpush1.msra.mxu0 %v185
    %342 = vmatprep.subr.mxu0 %v191
    %343 = vmatpush1.msra.mxu0 %v190
    %344 = vmatprep.subr.mxu0 %v196
    %345 = vmatpush1.msra.mxu0 %v195
    %346 = vmatprep.subr.mxu0 %v201
    %347 = vmatpush1.msra.mxu0 %v200
    %348 = vmatprep.subr.mxu0 %v206
    %349 = vmatpush1.msra.mxu0 %v205
    %350 = vmatprep.subr.mxu0 %v211
    %351 = vmatpush1.msra.mxu0 %v210
    %352 = vmatprep.subr.mxu0 %v216
    %353 = vmatpush1.msra.mxu0 %v215
    %354 = vmatprep.subr.mxu0 %v221
    %355 = vmatpush1.msra.mxu0 %v220
    %356 = vmatprep.subr.mxu0 %v226
    %357 = vmatpush1.msra.mxu0 %v225
    %358 = vmatprep.subr.mxu0 %v231
    %359 = vmatpush1.msra.mxu0 %v230
    %360 = vmatprep.subr.mxu0 %v236
    %361 = vmatpush1.msra.mxu0 %v235
    %362 = vmatprep.subr.mxu0 %v241
    %363 = vmatpush1.msra.mxu0 %v240
    %364 = vmatprep.subr.mxu0 %v246
    %365 = vmatpush1.msra.mxu0 %v245
    %366 = vmatprep.subr.mxu0 %v251
    %367 = vmatpush1.msra.mxu0 %v250
    %368 = vmatprep.subr.mxu0 %v256
    %369 = vmatpush1.msra.mxu0 %v255
    %370 = vmatprep.subr.mxu0 %v261
    %371 = vmatpush1.msra.mxu0 %v260
    %372 = vmatprep.subr.mxu0 0.0
    %373 = vmatpush1.msra.mxu0 0.0
    %374 = vmatprep.subr.mxu0 0.0
    %375 = vmatpush1.msra.mxu0 0.0
    %376 = vmatprep.subr.mxu0 0.0
    %377 = vmatpush1.msra.mxu0 0.0
    %378 = vmatprep.subr.mxu0 0.0
    %379 = vmatpush1.msra.mxu0 0.0
    %380 = vmatprep.subr.mxu0 0.0
    %381 = vmatpush1.msra.mxu0 0.0
    %382 = vmatprep.subr.mxu0 0.0
    %383 = vmatpush1.msra.mxu0 0.0
    %384 = vmatprep.subr.mxu0 0.0
    %385 = vmatpush1.msra.mxu0 0.0
    %386 = vmatprep.subr.mxu0 0.0
    %387 = vmatpush1.msra.mxu0 0.0
    %388 = vmatprep.subr.mxu0 0.0
    %389 = vmatpush1.msra.mxu0 0.0
    %390 = vmatprep.subr.mxu0 0.0
    %391 = vmatpush1.msra.mxu0 0.0
    %392 = vmatprep.subr.mxu0 0.0
    %393 = vmatpush1.msra.mxu0 0.0
    %394 = vmatprep.subr.mxu0 0.0
    %395 = vmatpush1.msra.mxu0 0.0
    %396 = vmatprep.subr.mxu0 0.0
    %397 = vmatpush1.msra.mxu0 0.0
    %398 = vmatprep.subr.mxu0 0.0
    %399 = vmatpush1.msra.mxu0 0.0
    %400 = vmatprep.subr.mxu0 0.0
    %401 = vmatpush1.msra.mxu0 0.0
    %402 = vmatprep.subr.mxu0 0.0
    %403 = vmatpush1.msra.mxu0 0.0
    %404 = vmatprep.mubr.f32.mxu0 0.0
    %405 = vmatmul.mubr.f32.gmra.mrb[0].mxu0 %v97
    %v406 = vpop.f32.mrb[0].mxu0
    %v407 = vadd.f32 0.0, %v406
    %v408 = vpop.f32.mrb[0].mxu0
    %v409 = vadd.f32 0.0, %v408
    %410 = vmatprep.mubr.f32.mxu0 0.0
    %411 = vmatmul.mubr.f32.gmra.mrb[0].mxu0 %v98
    %v412 = vpop.f32.mrb[0].mxu0
    %v413 = vadd.f32 0.0, %v412
    %v414 = vpop.f32.mrb[0].mxu0
    %v415 = vadd.f32 0.0, %v414
    %416 = vdwg.mxu0
    %417 = vmatprep.subr.mxu0 0.0
    %418 = vmatpush1.msra.mxu0 %v187
    %419 = vmatprep.subr.mxu0 0.0
    %420 = vmatpush1.msra.mxu0 %v192
    %421 = vmatprep.subr.mxu0 0.0
    %422 = vmatpush1.msra.mxu0 %v197
    %423 = vmatprep.subr.mxu0 0.0
    %424 = vmatpush1.msra.mxu0 %v202
    %425 = vmatprep.subr.mxu0 0.0
    %426 = vmatpush1.msra.mxu0 %v207
    %427 = vmatprep.subr.mxu0 0.0
    %428 = vmatpush1.msra.mxu0 %v212
    %429 = vmatprep.subr.mxu0 0.0
    %430 = vmatpush1.msra.mxu0 %v217
    %431 = vmatprep.subr.mxu0 0.0
    %432 = vmatpush1.msra.mxu0 %v222
    %433 = vmatprep.subr.mxu0 0.0
    %434 = vmatpush1.msra.mxu0 %v227
    %435 = vmatprep.subr.mxu0 0.0
    %436 = vmatpush1.msra.mxu0 %v232
    %437 = vmatprep.subr.mxu0 0.0
    %438 = vmatpush1.msra.mxu0 %v237
    %439 = vmatprep.subr.mxu0 0.0
    %440 = vmatpush1.msra.mxu0 %v242
    %441 = vmatprep.subr.mxu0 0.0
    %442 = vmatpush1.msra.mxu0 %v247
    %443 = vmatprep.subr.mxu0 0.0
    %444 = vmatpush1.msra.mxu0 %v252
    %445 = vmatprep.subr.mxu0 0.0
    %446 = vmatpush1.msra.mxu0 %v257
    %447 = vmatprep.subr.mxu0 0.0
    %448 = vmatpush1.msra.mxu0 %v262
    %449 = vmatprep.subr.mxu0 0.0
    %450 = vmatpush1.msra.mxu0 0.0
    %451 = vmatprep.subr.mxu0 0.0
    %452 = vmatpush1.msra.mxu0 0.0
    %453 = vmatprep.subr.mxu0 0.0
    %454 = vmatpush1.msra.mxu0 0.0
    %455 = vmatprep.subr.mxu0 0.0
    %456 = vmatpush1.msra.mxu0 0.0
    %457 = vmatprep.subr.mxu0 0.0
    %458 = vmatpush1.msra.mxu0 0.0
    %459 = vmatprep.subr.mxu0 0.0
    %460 = vmatpush1.msra.mxu0 0.0
    %461 = vmatprep.subr.mxu0 0.0
    %462 = vmatpush1.msra.mxu0 0.0
    %463 = vmatprep.subr.mxu0 0.0
    %464 = vmatpush1.msra.mxu0 0.0
    %465 = vmatprep.subr.mxu0 0.0
    %466 = vmatpush1.msra.mxu0 0.0
    %467 = vmatprep.subr.mxu0 0.0
    %468 = vmatpush1.msra.mxu0 0.0
    %469 = vmatprep.subr.mxu0 0.0
    %470 = vmatpush1.msra.mxu0 0.0
    %471 = vmatprep.subr.mxu0 0.0
    %472 = vmatpush1.msra.mxu0 0.0
    %473 = vmatprep.subr.mxu0 0.0
    %474 = vmatpush1.msra.mxu0 0.0
    %475 = vmatprep.subr.mxu0 0.0
    %476 = vmatpush1.msra.mxu0 0.0
    %477 = vmatprep.subr.mxu0 0.0
    %478 = vmatpush1.msra.mxu0 0.0
    %479 = vmatprep.subr.mxu0 0.0
    %480 = vmatpush1.msra.mxu0 0.0
    %481 = vmatprep.mubr.f32.mxu0 0.0
    %482 = vmatmul.mubr.f32.gmra.mrb[0].mxu0 %v97
    %v483 = vpop.f32.mrb[0].mxu0
    %v484 = vadd.f32 0.0, %v483
    %v485 = vpop.f32.mrb[0].mxu0
    %486 = vmatprep.mubr.f32.mxu0 0.0
    %487 = vmatmul.mubr.f32.gmra.mrb[0].mxu0 %v98
    %v488 = vpop.f32.mrb[0].mxu0
    %v489 = vadd.f32 0.0, %v488
    %v490 = vpop.f32.mrb[0].mxu0
    %491 = vdwg.mxu0
    %492 = vmatprep.subr.mxu0 %v104
    %493 = vmatpush1.msra.mxu0 %v103
    %494 = vmatprep.subr.mxu0 %v109
    %495 = vmatpush1.msra.mxu0 %v108
    %496 = vmatprep.subr.mxu0 %v114
    %497 = vmatpush1.msra.mxu0 %v113
    %498 = vmatprep.subr.mxu0 %v119
    %499 = vmatpush1.msra.mxu0 %v118
    %500 = vmatprep.subr.mxu0 %v124
    %501 = vmatpush1.msra.mxu0 %v123
    %502 = vmatprep.subr.mxu0 %v129
    %503 = vmatpush1.msra.mxu0 %v128
    %504 = vmatprep.subr.mxu0 %v134
    %505 = vmatpush1.msra.mxu0 %v133
    %506 = vmatprep.subr.mxu0 %v139
    %507 = vmatpush1.msra.mxu0 %v138
    %508 = vmatprep.subr.mxu0 %v144
    %509 = vmatpush1.msra.mxu0 %v143
    %510 = vmatprep.subr.mxu0 %v149
    %511 = vmatpush1.msra.mxu0 %v148
    %512 = vmatprep.subr.mxu0 %v154
    %513 = vmatpush1.msra.mxu0 %v153
    %514 = vmatprep.subr.mxu0 %v159
    %515 = vmatpush1.msra.mxu0 %v158
    %516 = vmatprep.subr.mxu0 %v164
    %517 = vmatpush1.msra.mxu0 %v163
    %518 = vmatprep.subr.mxu0 %v169
    %519 = vmatpush1.msra.mxu0 %v168
    %520 = vmatprep.subr.mxu0 %v174
    %521 = vmatpush1.msra.mxu0 %v173
    %522 = vmatprep.subr.mxu0 %v179
    %523 = vmatpush1.msra.mxu0 %v178
    %524 = vmatprep.subr.mxu0 0.0
    %525 = vmatpush1.msra.mxu0 0.0
    %526 = vmatprep.subr.mxu0 0.0
    %527 = vmatpush1.msra.mxu0 0.0
    %528 = vmatprep.subr.mxu0 0.0
    %529 = vmatpush1.msra.mxu0 0.0
    %530 = vmatprep.subr.mxu0 0.0
    %531 = vmatpush1.msra.mxu0 0.0
    %532 = vmatprep.subr.mxu0 0.0
    %533 = vmatpush1.msra.mxu0 0.0
    %534 = vmatprep.subr.mxu0 0.0
    %535 = vmatpush1.msra.mxu0 0.0
    %536 = vmatprep.subr.mxu0 0.0
    %537 = vmatpush1.msra.mxu0 0.0
    %538 = vmatprep.subr.mxu0 0.0
    %539 = vmatpush1.msra.mxu0 0.0
    %540 = vmatprep.subr.mxu0 0.0
    %541 = vmatpush1.msra.mxu0 0.0
    %542 = vmatprep.subr.mxu0 0.0
    %543 = vmatpush1.msra.mxu0 0.0
    %544 = vmatprep.subr.mxu0 0.0
    %545 = vmatpush1.msra.mxu0 0.0
    %546 = vmatprep.subr.mxu0 0.0
    %547 = vmatpush1.msra.mxu0 0.0
    %548 = vmatprep.subr.mxu0 0.0
    %549 = vmatpush1.msra.mxu0 0.0
    %550 = vmatprep.subr.mxu0 0.0
    %551 = vmatpush1.msra.mxu0 0.0
    %552 = vmatprep.subr.mxu0 0.0
    %553 = vmatpush1.msra.mxu0 0.0
    %554 = vmatprep.subr.mxu0 0.0
    %555 = vmatpush1.msra.mxu0 0.0
    %556 = vmatprep.mubr.f32.mxu0 0.0
    %557 = vmatmul.mubr.f32.gmra.mrb[0].mxu0 %v95
    %v558 = vpop.f32.mrb[0].mxu0
    %v559 = vadd.f32 %v330, %v558
    %v560 = vpop.f32.mrb[0].mxu0
    %v561 = vadd.f32 %v332, %v560
    %562 = vmatprep.mubr.f32.mxu0 0.0
    %563 = vmatmul.mubr.f32.gmra.mrb[0].mxu0 %v96
    %v564 = vpop.f32.mrb[0].mxu0
    %v565 = vadd.f32 %v336, %v564
    %v566 = vpop.f32.mrb[0].mxu0
    %v567 = vadd.f32 %v338, %v566
    %568 = vdwg.mxu0
    %569 = vmatprep.subr.mxu0 %v106
    %570 = vmatpush1.msra.mxu0 %v105
    %571 = vmatprep.subr.mxu0 %v111
    %572 = vmatpush1.msra.mxu0 %v110
    %573 = vmatprep.subr.mxu0 %v116
    %574 = vmatpush1.msra.mxu0 %v115
    %575 = vmatprep.subr.mxu0 %v121
    %576 = vmatpush1.msra.mxu0 %v120
    %577 = vmatprep.subr.mxu0 %v126
    %578 = vmatpush1.msra.mxu0 %v125
    %579 = vmatprep.subr.mxu0 %v131
    %580 = vmatpush1.msra.mxu0 %v130
    %581 = vmatprep.subr.mxu0 %v136
    %582 = vmatpush1.msra.mxu0 %v135
    %583 = vmatprep.subr.mxu0 %v141
    %584 = vmatpush1.msra.mxu0 %v140
    %585 = vmatprep.subr.mxu0 %v146
    %586 = vmatpush1.msra.mxu0 %v145
    %587 = vmatprep.subr.mxu0 %v151
    %588 = vmatpush1.msra.mxu0 %v150
    %589 = vmatprep.subr.mxu0 %v156
    %590 = vmatpush1.msra.mxu0 %v155
    %591 = vmatprep.subr.mxu0 %v161
    %592 = vmatpush1.msra.mxu0 %v160
    %593 = vmatprep.subr.mxu0 %v166
    %594 = vmatpush1.msra.mxu0 %v165
    %595 = vmatprep.subr.mxu0 %v171
    %596 = vmatpush1.msra.mxu0 %v170
    %597 = vmatprep.subr.mxu0 %v176
    %598 = vmatpush1.msra.mxu0 %v175
    %599 = vmatprep.subr.mxu0 %v181
    %600 = vmatpush1.msra.mxu0 %v180
    %601 = vmatprep.subr.mxu0 0.0
    %602 = vmatpush1.msra.mxu0 0.0
    %603 = vmatprep.subr.mxu0 0.0
    %604 = vmatpush1.msra.mxu0 0.0
    %605 = vmatprep.subr.mxu0 0.0
    %606 = vmatpush1.msra.mxu0 0.0
    %607 = vmatprep.subr.mxu0 0.0
    %608 = vmatpush1.msra.mxu0 0.0
    %609 = vmatprep.subr.mxu0 0.0
    %610 = vmatpush1.msra.mxu0 0.0
    %611 = vmatprep.subr.mxu0 0.0
    %612 = vmatpush1.msra.mxu0 0.0
    %613 = vmatprep.subr.mxu0 0.0
    %614 = vmatpush1.msra.mxu0 0.0
    %615 = vmatprep.subr.mxu0 0.0
    %616 = vmatpush1.msra.mxu0 0.0
    %617 = vmatprep.subr.mxu0 0.0
    %618 = vmatpush1.msra.mxu0 0.0
    %619 = vmatprep.subr.mxu0 0.0
    %620 = vmatpush1.msra.mxu0 0.0
    %621 = vmatprep.subr.mxu0 0.0
    %622 = vmatpush1.msra.mxu0 0.0
    %623 = vmatprep.subr.mxu0 0.0
    %624 = vmatpush1.msra.mxu0 0.0
    %625 = vmatprep.subr.mxu0 0.0
    %626 = vmatpush1.msra.mxu0 0.0
    %627 = vmatprep.subr.mxu0 0.0
    %628 = vmatpush1.msra.mxu0 0.0
    %629 = vmatprep.subr.mxu0 0.0
    %630 = vmatpush1.msra.mxu0 0.0
    %631 = vmatprep.subr.mxu0 0.0
    %632 = vmatpush1.msra.mxu0 0.0
    %633 = vmatprep.mubr.f32.mxu0 0.0
    %634 = vmatmul.mubr.f32.gmra.mrb[0].mxu0 %v95
    %v635 = vpop.f32.mrb[0].mxu0
    %v636 = vadd.f32 %v407, %v635
    %v637 = vpop.f32.mrb[0].mxu0
    %v638 = vadd.f32 %v409, %v637
    %639 = vmatprep.mubr.f32.mxu0 0.0
    %640 = vmatmul.mubr.f32.gmra.mrb[0].mxu0 %v96
    %v641 = vpop.f32.mrb[0].mxu0
    %v642 = vadd.f32 %v413, %v641
    %v643 = vpop.f32.mrb[0].mxu0
    %v644 = vadd.f32 %v415, %v643
    %645 = vdwg.mxu0
    %646 = vmatprep.subr.mxu0 0.0
    %647 = vmatpush1.msra.mxu0 %v107
    %648 = vmatprep.subr.mxu0 0.0
    %649 = vmatpush1.msra.mxu0 %v112
    %650 = vmatprep.subr.mxu0 0.0
    %651 = vmatpush1.msra.mxu0 %v117
    %652 = vmatprep.subr.mxu0 0.0
    %653 = vmatpush1.msra.mxu0 %v122
    %654 = vmatprep.subr.mxu0 0.0
    %655 = vmatpush1.msra.mxu0 %v127
    %656 = vmatprep.subr.mxu0 0.0
    %657 = vmatpush1.msra.mxu0 %v132
    %658 = vmatprep.subr.mxu0 0.0
    %659 = vmatpush1.msra.mxu0 %v137
    %660 = vmatprep.subr.mxu0 0.0
    %661 = vmatpush1.msra.mxu0 %v142
    %662 = vmatprep.subr.mxu0 0.0
    %663 = vmatpush1.msra.mxu0 %v147
    %664 = vmatprep.subr.mxu0 0.0
    %665 = vmatpush1.msra.mxu0 %v152
    %666 = vmatprep.subr.mxu0 0.0
    %667 = vmatpush1.msra.mxu0 %v157
    %668 = vmatprep.subr.mxu0 0.0
    %669 = vmatpush1.msra.mxu0 %v162
    %670 = vmatprep.subr.mxu0 0.0
    %671 = vmatpush1.msra.mxu0 %v167
    %672 = vmatprep.subr.mxu0 0.0
    %673 = vmatpush1.msra.mxu0 %v172
    %674 = vmatprep.subr.mxu0 0.0
    %675 = vmatpush1.msra.mxu0 %v177
    %676 = vmatprep.subr.mxu0 0.0
    %677 = vmatpush1.msra.mxu0 %v182
    %678 = vmatprep.subr.mxu0 0.0
    %679 = vmatpush1.msra.mxu0 0.0
    %680 = vmatprep.subr.mxu0 0.0
    %681 = vmatpush1.msra.mxu0 0.0
    %682 = vmatprep.subr.mxu0 0.0
    %683 = vmatpush1.msra.mxu0 0.0
    %684 = vmatprep.subr.mxu0 0.0
    %685 = vmatpush1.msra.mxu0 0.0
    %686 = vmatprep.subr.mxu0 0.0
    %687 = vmatpush1.msra.mxu0 0.0
    %688 = vmatprep.subr.mxu0 0.0
    %689 = vmatpush1.msra.mxu0 0.0
    %690 = vmatprep.subr.mxu0 0.0
    %691 = vmatpush1.msra.mxu0 0.0
    %692 = vmatprep.subr.mxu0 0.0
    %693 = vmatpush1.msra.mxu0 0.0
    %694 = vmatprep.subr.mxu0 0.0
    %695 = vmatpush1.msra.mxu0 0.0
    %696 = vmatprep.subr.mxu0 0.0
    %697 = vmatpush1.msra.mxu0 0.0
    %698 = vmatprep.subr.mxu0 0.0
    %699 = vmatpush1.msra.mxu0 0.0
    %700 = vmatprep.subr.mxu0 0.0
    %701 = vmatpush1.msra.mxu0 0.0
    %702 = vmatprep.subr.mxu0 0.0
    %703 = vmatpush1.msra.mxu0 0.0
    %704 = vmatprep.subr.mxu0 0.0
    %705 = vmatpush1.msra.mxu0 0.0
    %706 = vmatprep.subr.mxu0 0.0
    %707 = vmatpush1.msra.mxu0 0.0
    %708 = vmatprep.subr.mxu0 0.0
    %709 = vmatpush1.msra.mxu0 0.0
    %710 = vmatprep.mubr.f32.mxu0 0.0
    %711 = vmatmul.mubr.f32.gmra.mrb[0].mxu0 %v95
    %v712 = vpop.f32.mrb[0].mxu0
    %v713 = vadd.f32 %v484, %v712
    %v714 = vpop.f32.mrb[0].mxu0
    %715 = vmatprep.mubr.f32.mxu0 0.0
    %716 = vmatmul.mubr.f32.gmra.mrb[0].mxu0 %v96
    %v717 = vpop.f32.mrb[0].mxu0
    %v718 = vadd.f32 %v489, %v717
    %v719 = vpop.f32.mrb[0].mxu0
    %720 = vdwg.mxu0
    %v721 = vld [vmem:[%s5] sm:$0x1f]
    %v723 = vlaneseq
    %v724 = vshrl.u32 %v723, 7
    %v725 = vsub.s32 0, %v724
    %v726 = vrot.slane %v721, %v725
    %v727 = vlaneseq
    %v728 = vshrl.u32 %v727, 7
    %v729 = vsub.s32 1, %v728
    %v730 = vrot.slane %v721, %v729
    %v731 = vlaneseq
    %v732 = vshrl.u32 %v731, 7
    %v733 = vsub.s32 2, %v732
    %v734 = vrot.slane %v721, %v733
    %v735 = vlaneseq
    %v736 = vshrl.u32 %v735, 7
    %v737 = vsub.s32 3, %v736
    %v738 = vrot.slane %v721, %v737
    %v739 = vlaneseq
    %v740 = vshrl.u32 %v739, 7
    %v741 = vsub.s32 4, %v740
    %v742 = vrot.slane %v721, %v741
    %v748 = vadd.f32 %v559, %v726
    %v749 = vadd.f32 %v561, %v730
    %v750 = vadd.f32 %v636, %v734
    %v751 = vadd.f32 %v638, %v738
    %v752 = vadd.f32 %v713, %v742
    %v753 = vadd.f32 %v565, %v726
    %v754 = vadd.f32 %v567, %v730
    %v755 = vadd.f32 %v642, %v734
    %v756 = vadd.f32 %v644, %v738
    %v757 = vadd.f32 %v718, %v742
    %v758 = vadd.f32 %v749, 1.0
    %v759 = vadd.f32 %v754, 1.0
    %v760 = vxor.u32 %v758, 2147483648
    %v761 = vxor.u32 %v759, 2147483648
    %v762 = vmul.f32 %v760, 1.442695
    %v763 = vpow.pop %v762
    %v764 = vmul.f32 %v761, 1.442695
    %v765 = vpow.pop %v764
    %v766 = vadd.f32 %v763, 1.0
    %v767 = vadd.f32 %v765, 1.0
    %v768 = vrcp.pop %v766
    %v769 = vmul.f32 1.0, %v768
    %v770 = vrcp.pop %v767
    %v771 = vmul.f32 1.0, %v770
    %v772 = vmul.f32 %v99, %v769
    %v773 = vmul.f32 %v100, %v771
    %v774 = vadd.f32 %v750, 1.0
    %v775 = vadd.f32 %v755, 1.0
    %v776 = vxor.u32 %v774, 2147483648
    %v777 = vxor.u32 %v775, 2147483648
    %v778 = vmul.f32 %v776, 1.442695
    %v779 = vpow.pop %v778
    %v780 = vmul.f32 %v777, 1.442695
    %v781 = vpow.pop %v780
    %v782 = vadd.f32 %v779, 1.0
    %v783 = vadd.f32 %v781, 1.0
    %v784 = vrcp.pop %v782
    %v785 = vmul.f32 1.0, %v784
    %v786 = vrcp.pop %v783
    %v787 = vmul.f32 1.0, %v786
    %v788 = vmul.f32 %v101, %v785
    %v789 = vmul.f32 %v102, %v787
    %v790 = vadd.f32 %v772, %v788
    %v791 = vadd.f32 %v773, %v789
    %v792 = vtanh.pop %v751
    %v793 = vtanh.pop %v756
    %v794 = vxor.u32 %v748, 2147483648
    %v795 = vxor.u32 %v753, 2147483648
    %v796 = vmul.f32 %v794, 1.442695
    %v797 = vpow.pop %v796
    %v798 = vmul.f32 %v795, 1.442695
    %v799 = vpow.pop %v798
    %v800 = vadd.f32 %v797, 1.0
    %v801 = vadd.f32 %v799, 1.0
    %v802 = vrcp.pop %v800
    %v803 = vmul.f32 1.0, %v802
    %v804 = vrcp.pop %v801
    %v805 = vmul.f32 1.0, %v804
    %v806 = vmul.f32 %v792, %v803
    %v807 = vmul.f32 %v793, %v805
    %v808 = vadd.f32 %v790, %v806
    %v809 = vadd.f32 %v791, %v807
    %v810 = vxor.u32 %v752, 2147483648
    %v811 = vxor.u32 %v757, 2147483648
    %v812 = vmul.f32 %v810, 1.442695
    %v813 = vpow.pop %v812
    %v814 = vmul.f32 %v811, 1.442695
    %v815 = vpow.pop %v814
    %v816 = vadd.f32 %v813, 1.0
    %v817 = vadd.f32 %v815, 1.0
    %v818 = vrcp.pop %v816
    %v819 = vmul.f32 1.0, %v818
    %v820 = vrcp.pop %v817
    %v821 = vmul.f32 1.0, %v820
    %v822 = vtanh.pop %v808
    %v823 = vtanh.pop %v809
    %v824 = vmul.f32 %v819, %v822
    %v825 = vmul.f32 %v821, %v823
    %826 = vst [vmem:[#allocation11] sm:$0xff] %v824
    %827 = vst [vmem:[#allocation11 + $0x8] sm:$0xff] %v825
    %828 = vst [vmem:[#allocation12] sm:$0xff] %v808
    %829 = vst [vmem:[#allocation12 + $0x8] sm:$0xff] %v809
    // Predicated region
    $region46: #{tpu_custom_call.1} parent=1 // pred_check
      _
    $region47: #{tpu_custom_call.1} parent=1 // pred_check_branch
      %831 = sbr.rel (0) target = $region49
    $region48: #{tpu_custom_call.1} parent=1 // pred_region
      %s833 = ssub.s32 256, 256
      %834 = vsyncadd [#allocation4], %s833
      %s835 = sshll.u32 [#allocation11], 4
      %s836 = int_to_ptr.vmem [resolvable:$true] %s835
      %841 = dma.vmem_to_hbm [thread:$0]  %s836, 256, %s6, [#allocation4], 128, 128, 8
    $region49: #{tpu_custom_call.1} parent=1 // pred_fallthru
      _
    // Predicated region
    $region50: #{tpu_custom_call.1} parent=1 // pred_check
      _
    $region51: #{tpu_custom_call.1} parent=1 // pred_check_branch
      %843 = sbr.rel (0) target = $region53
    $region52: #{tpu_custom_call.1} parent=1 // pred_region
      %s845 = ssub.s32 256, 256
      %846 = vsyncadd [#allocation13], %s845
      %s847 = sshll.u32 [#allocation12], 4
      %s848 = int_to_ptr.vmem [resolvable:$true] %s847
      %853 = dma.vmem_to_hbm [thread:$0]  %s848, 256, %s7, [#allocation13], 128, 128, 8
    $region53: #{tpu_custom_call.1} parent=1 // pred_fallthru
      _
    // Predicated region
    $region54: #{tpu_custom_call.1} parent=1 // pred_check
      _
    $region55: #{tpu_custom_call.1} parent=1 // pred_check_branch
      %855 = sbr.rel (0) target = $region57
    $region56: #{tpu_custom_call.1} parent=1 // pred_region
      %856 = dma.done [#allocation4], 256
    $region57: #{tpu_custom_call.1} parent=1 // pred_fallthru
      _
    // Predicated region
    $region58: #{tpu_custom_call.1} parent=1 // pred_check
      _
    $region59: #{tpu_custom_call.1} parent=1 // pred_check_branch
      %858 = sbr.rel (0) target = $region61
    $region60: #{tpu_custom_call.1} parent=1 // pred_region
      %859 = dma.done [#allocation13], 256
    $region61: #{tpu_custom_call.1} parent=1 // pred_fallthru
      _
    %860 = vsyncpa [#allocation3], 1
    %861 = vsyncpa [#allocation6], 1
    %862 = vsyncpa [#allocation9], 1
    %863 = vsyncpa [#allocation4], 1
    %864 = vsyncpa [#allocation13], 1

</llo_original>
